<compile_context>
chip_gen: v6e
topology: v6e:2x2x1
jax: 0.10.0
libtpu: 0.0.40
codegen_flags: <defaults>
</compile_context>

<pallas_src>
import math

import jax
import jax.numpy as jnp
from jax.experimental import pallas as pl
from jax.experimental.pallas import tpu as pltpu

_LANES = 128


# ----------------------------------------------------------------------------
# Buffer construction (mirrors PositionalEncoding2D.__init__) — plain JAX glue.
# ----------------------------------------------------------------------------
def make_pe_buffer(d_model: int, max_h: int, max_w: int) -> jnp.ndarray:
    """Returns pe of shape (max_h, max_w, d_model), float32."""
    if d_model % 4 != 0:
        # The original PyTorch construction requires d_model // 2 to be even
        # (interleaved sin/cos columns) and d_model even (2 * half == C).
        raise ValueError(f"d_model must be a multiple of 4, got {d_model}")
    half = d_model // 2

    div_term = jnp.exp(
        jnp.arange(0, half, 2, dtype=jnp.float32) * -(math.log(10000.0) / half)
    )  # (half // 2,)

    pos_h = jnp.arange(max_h, dtype=jnp.float32)[:, None]
    pe_h = jnp.zeros((max_h, half), dtype=jnp.float32)
    pe_h = pe_h.at[:, 0::2].set(jnp.sin(pos_h * div_term))
    pe_h = pe_h.at[:, 1::2].set(jnp.cos(pos_h * div_term))

    pos_w = jnp.arange(max_w, dtype=jnp.float32)[:, None]
    pe_w = jnp.zeros((max_w, half), dtype=jnp.float32)
    pe_w = pe_w.at[:, 0::2].set(jnp.sin(pos_w * div_term))
    pe_w = pe_w.at[:, 1::2].set(jnp.cos(pos_w * div_term))

    pe_h_exp = jnp.broadcast_to(pe_h[:, None, :], (max_h, max_w, half))
    pe_w_exp = jnp.broadcast_to(pe_w[None, :, :], (max_h, max_w, half))
    return jnp.concatenate([pe_h_exp, pe_w_exp], axis=-1)  # (max_h, max_w, C)


def precompute_pe_chw(pe_buffer: jnp.ndarray, h: int, w: int, dtype) -> jnp.ndarray:
    """Hoisted out of the forward path: slice + permute + cast, done ONCE.

    Matches self.pe[:h, :w, :].permute(2, 0, 1) in the PyTorch forward.
    Returns (d_model, h, w) in the model dtype.
    """
    return jnp.transpose(pe_buffer[:h, :w, :], (2, 0, 1)).astype(dtype)


# ----------------------------------------------------------------------------
# Hardware- / dtype-aware tiling helpers.
# ----------------------------------------------------------------------------
def _hw_params():
    """(target_block_bytes, vmem_limit_bytes), chosen per TPU generation.

    Conservative defaults (safe everywhere) if the device can't be queried.
    """
    target_block_bytes = 2 * 1024 * 1024     # v5e-friendly default
    vmem_limit_bytes = 48 * 1024 * 1024
    try:
        kind = jax.devices()[0].device_kind.lower()
        if "v7" in kind:
            # Only 64 MiB physical VMEM but 3.2 TB/s HBM: bigger blocks
            # amortize the ~0.35 us per-grid-step overhead; keep headroom.
            target_block_bytes = 6 * 1024 * 1024
            vmem_limit_bytes = 40 * 1024 * 1024
        elif "v6" in kind:
            # 128 MiB VMEM, ~1.3 TB/s HBM — the extra VMEM is otherwise unused.
            target_block_bytes = 8 * 1024 * 1024
            vmem_limit_bytes = 96 * 1024 * 1024
        # v5e / v5p / unknown: keep the conservative defaults.
    except Exception:
        pass
    return target_block_bytes, vmem_limit_bytes


def _sublane(itemsize: int) -> int:
    """Native sublane tile: 8 (f32), 16 (bf16), 32 (int8 / fp8)."""
    return max(8, 32 // max(1, itemsize))


def _round_down(x: int, m: int) -> int:
    return max(m, (x // m) * m)


# ----------------------------------------------------------------------------
# Pallas kernel: elementwise add of a (broadcastable) PE tile onto an x tile.
# Serves all paths via numpy broadcasting:
#   (r,128)+(r,128) ; (B,r,128)+(r,128) ; (B,L)+(1,L)
# ----------------------------------------------------------------------------
def _add_pe_kernel(x_ref, pe_ref, o_ref):
    o_ref[...] = x_ref[...] + pe_ref[...]


def positional_encoding_2d(x: jnp.ndarray, pe_chw: jnp.ndarray) -> jnp.ndarray:
    """
    Args:
      x: (B, C, H, W) feature map, C == d_model.
      pe_chw: (C, H, W) PE slice, already permuted/cast by precompute_pe_chw.
    Returns:
      (B, C, H, W) with positional encoding added.
    """
    B, C, H, W = x.shape
    if pe_chw.shape != (C, H, W):
        raise ValueError(f"pe_chw shape {pe_chw.shape} != {(C, H, W)}")
    if pe_chw.dtype != x.dtype:
        # Should already be cast at init; defensive (keeps the kernel a flat add).
        pe_chw = pe_chw.astype(x.dtype)

    itemsize = jnp.dtype(x.dtype).itemsize
    n_elems = C * H * W
    target_block_bytes, vmem_limit_bytes = _hw_params()
    cost = pl.CostEstimate(
        flops=B * n_elems,
        transcendentals=0,
        bytes_accessed=(2 * B * n_elems + n_elems) * itemsize,
    )

    if n_elems % _LANES == 0:
        # ---------------- fast path: lane-dense rows of 128 -----------------
        n_rows = n_elems // _LANES
        sub = _sublane(itemsize)
        x_flat = x.reshape(B, n_rows, _LANES)        # free view of NCHW memory
        pe_flat = pe_chw.reshape(n_rows, _LANES)

        fold_batch = B * sub * _LANES * itemsize <= target_block_bytes
        if fold_batch:
            # Fold the batch into the block: grid shrinks by B× (fewer per-step
            # overheads / DMA descriptors); the pe tile is read once per tile
            # and broadcast across the batch inside the kernel.
            r = _round_down(target_block_bytes // (B * _LANES * itemsize), sub)
            r = n_rows if r >= n_rows else r
            out_flat = pl.pallas_call(
                _add_pe_kernel,
                out_shape=jax.ShapeDtypeStruct((B, n_rows, _LANES), x.dtype),
                grid_spec=pl.GridSpec(
                    grid=(pl.cdiv(n_rows, r),),        # ragged tail is fine
                    in_specs=[
                        pl.BlockSpec((B, r, _LANES), lambda t: (0, t, 0)),
                        pl.BlockSpec((r, _LANES), lambda t: (t, 0)),
                    ],
                    out_specs=pl.BlockSpec((B, r, _LANES), lambda t: (0, t, 0)),
                ),
                compiler_params=pltpu.CompilerParams(
                    dimension_semantics=("parallel",),
                    vmem_limit_bytes=vmem_limit_bytes,
                ),
                cost_estimate=cost,
            )(x_flat, pe_flat)
        else:
            # Large batch: 2-D grid with the tile axis OUTER so each pe tile is
            # DMA'd once and reused across the whole (inner) batch axis.
            r = _round_down(target_block_bytes // (_LANES * itemsize), sub)
            r = n_rows if r >= n_rows else r
            out_flat = pl.pallas_call(
                _add_pe_kernel,
                out_shape=jax.ShapeDtypeStruct((B, n_rows, _LANES), x.dtype),
                grid_spec=pl.GridSpec(
                    grid=(pl.cdiv(n_rows, r), B),
                    in_specs=[
                        pl.BlockSpec((None, r, _LANES), lambda t, b: (b, t, 0)),
                        pl.BlockSpec((r, _LANES), lambda t, b: (t, 0)),
                    ],
                    out_specs=pl.BlockSpec((None, r, _LANES), lambda t, b: (b, t, 0)),
                ),
                compiler_params=pltpu.CompilerParams(
                    dimension_semantics=("parallel", "parallel"),
                    vmem_limit_bytes=vmem_limit_bytes,
                ),
                cost_estimate=cost,
            )(x_flat, pe_flat)
        return out_flat.reshape(B, C, H, W)

    # -------- fallback: C*H*W not a multiple of 128 — still lane-dense ------
    # Flatten to (B, n_elems) / (1, n_elems); tile the flat axis in 128-lane
    # multiples; pl.cdiv + full-extent leading dims handle the ragged tail.
    # TODO(synk): for very small B this leaves some sublanes idle per vreg; a
    # padded (n_rows, 128) reshape of pe + padded x copy would fix it at the
    # cost of an extra HBM pass — not worth it for this rare path.
    x2 = x.reshape(B, n_elems)
    pe2 = pe_chw.reshape(1, n_elems)
    L = _round_down(target_block_bytes // max(1, B * itemsize), _LANES)
    L = n_elems if L >= n_elems else L
    out2 = pl.pallas_call(
        _add_pe_kernel,
        out_shape=jax.ShapeDtypeStruct((B, n_elems), x.dtype),
        grid_spec=pl.GridSpec(
            grid=(pl.cdiv(n_elems, L),),
            in_specs=[
                pl.BlockSpec((B, L), lambda t: (0, t)),
                pl.BlockSpec((1, L), lambda t: (0, t)),
            ],
            out_specs=pl.BlockSpec((B, L), lambda t: (0, t)),
        ),
        compiler_params=pltpu.CompilerParams(
            dimension_semantics=("parallel",),
            vmem_limit_bytes=vmem_limit_bytes,
        ),
        cost_estimate=cost,
    )(x2, pe2)
    return out2.reshape(B, C, H, W)


if __name__ == "__main__":
    key = jax.random.PRNGKey(0)
    k1, k2 = jax.random.split(key)

    # --- Fast path: C*H*W multiple of 128 (lane-dense, batch folded) --------
    B, C, H, W = 2, 8, 16, 16            # C*H*W = 2048 -> 16 rows of 128
    max_h, max_w = 32, 32
    x = jax.random.normal(k1, (B, C, H, W), dtype=jnp.float32)

    pe_buffer = make_pe_buffer(d_model=C, max_h=max_h, max_w=max_w)   # "__init__"
    pe_chw = precompute_pe_chw(pe_buffer, H, W, x.dtype)              # hoisted prep

    out = jax.block_until_ready(positional_encoding_2d(x, pe_chw))
    ref = x + jnp.transpose(pe_buffer[:H, :W, :], (2, 0, 1))[None].astype(x.dtype)
    assert out.shape == (B, C, H, W)
    assert jnp.allclose(out, ref, atol=1e-6), "fast-path mismatch"

    # --- Same shapes in bf16 (exercises dtype-aware sublane tiling) ---------
    xb = x.astype(jnp.bfloat16)
    pe_b = precompute_pe_chw(pe_buffer, H, W, jnp.bfloat16)
    outb = jax.block_until_ready(positional_encoding_2d(xb, pe_b))
    refb = xb + jnp.transpose(pe_buffer[:H, :W, :], (2, 0, 1))[None].astype(jnp.bfloat16)
    assert jnp.allclose(outb.astype(jnp.float32), refb.astype(jnp.float32),
                        atol=1e-2), "bf16 mismatch"

    # --- Fallback path: C*H*W not a multiple of 128 --------------------------
    B2, C2, H2, W2 = 2, 4, 5, 7          # C*H*W = 140
    x2 = jax.random.normal(k2, (B2, C2, H2, W2), dtype=jnp.float32)
    pe_buffer2 = make_pe_buffer(d_model=C2, max_h=16, max_w=16)
    pe_chw2 = precompute_pe_chw(pe_buffer2, H2, W2, x2.dtype)
    out2 = jax.block_until_ready(positional_encoding_2d(x2, pe_chw2))
    ref2 = x2 + jnp.transpose(pe_buffer2[:H2, :W2, :], (2, 0, 1))[None].astype(x2.dtype)
    assert jnp.allclose(out2, ref2, atol=1e-6), "fallback mismatch"

    print("KERNEL_OK")
</pallas_src>

<mosaic_0001>
module attributes {stable_mosaic.version = 11 : i64} {
  func.func @_add_pe_kernel(%arg0: i32, %arg1: memref<2x16x128xf32, #tpu.memory_space<vmem>>, %arg2: memref<16x128xf32, #tpu.memory_space<vmem>>, %arg3: memref<2x16x128xf32, #tpu.memory_space<vmem>>) attributes {dimension_semantics = [#tpu.dimension_semantics<parallel>], iteration_bounds = array<i64: 1>, scalar_prefetch = 0 : i64, scratch_operands = 0 : i64, tpu.core_type = #tpu.core_type<tc>, window_params = [{transform_indices = @transform_0, window_bounds = array<i64: 2, 16, 128>}, {transform_indices = @transform_1, window_bounds = array<i64: 16, 128>}, {transform_indices = @transform_2, window_bounds = array<i64: 2, 16, 128>}]} {
    %c0 = arith.constant 0 : index
    %c0_0 = arith.constant 0 : index
    %c0_1 = arith.constant 0 : index
    %0 = vector.load %arg1[%c0, %c0_0, %c0_1] : memref<2x16x128xf32, #tpu.memory_space<vmem>>, vector<2x16x128xf32>
    %c0_2 = arith.constant 0 : index
    %c0_3 = arith.constant 0 : index
    %1 = vector.load %arg2[%c0_2, %c0_3] : memref<16x128xf32, #tpu.memory_space<vmem>>, vector<16x128xf32>
    %2 = vector.shape_cast %1 : vector<16x128xf32> to vector<1x16x128xf32>
    %3 = vector.broadcast %2 : vector<1x16x128xf32> to vector<2x16x128xf32>
    %4 = arith.addf %0, %3 : vector<2x16x128xf32>
    %c0_4 = arith.constant 0 : index
    %c0_5 = arith.constant 0 : index
    %c0_6 = arith.constant 0 : index
    %5 = vector.load %arg3[%c0_4, %c0_5, %c0_6] : memref<2x16x128xf32, #tpu.memory_space<vmem>>, vector<2x16x128xf32>
    tpu.vector_store %arg3[%c0_4, %c0_5, %c0_6], %4 {strides = array<i32>} : memref<2x16x128xf32, #tpu.memory_space<vmem>>, vector<2x16x128xf32>,
    return
  }
  func.func @transform_0(%arg0: i32) -> (i32, i32, i32) {
    %c0_i32 = arith.constant 0 : i32
    %c0_i32_0 = arith.constant 0 : i32
    %c0_i32_1 = arith.constant 0 : i32
    return %c0_i32, %arg0, %c0_i32_0 : i32, i32, i32
  }
  func.func @transform_1(%arg0: i32) -> (i32, i32) {
    %c0_i32 = arith.constant 0 : i32
    %c0_i32_0 = arith.constant 0 : i32
    return %arg0, %c0_i32 : i32, i32
  }
  func.func @transform_2(%arg0: i32) -> (i32, i32, i32) {
    %c0_i32 = arith.constant 0 : i32
    %c0_i32_0 = arith.constant 0 : i32
    %c0_i32_1 = arith.constant 0 : i32
    return %c0_i32, %arg0, %c0_i32_0 : i32, i32, i32
  }
}

</mosaic_0001>

<llo_original>
// kernel: tpu_custom_call.1
$region0: #{tpu_custom_call.1}
  #allocation0 [shape = 'u32[]', space=smem, size = 0x4, offset = 0x4, fixed_abs, tag = 'smem constant byte address 0x4 - core index']
  #allocation1 [shape = 'u32[144,128]{1,0:T(1,128)}', space=vmem, size = 0x12000, scoped, tag = 'internal scratch']
  %s0 = inlined_call_operand.hbm [shape: f32[2,16,128], index: 0, kind: input, shape index: {}]
  %s1 = inlined_call_operand.hbm [shape: f32[16,128], index: 1, kind: input, shape index: {}]
  %s2 = inlined_call_operand.hbm [shape: f32[2,16,128], index: 2, kind: output, shape index: {}]
  %s3 = sld [smem:[#allocation0]]
  $region26: #{tpu_custom_call.1} parent=0
    _
  %s5 = ssub.s32 1, %s3
  %s6 = scalar_select 0, %s5, %s3
  $region1: #{tpu_custom_call.1} parent=0
    #allocation2 [shape = 'u8[16384]{0}', space=vmem, size = 0x4000, scoped, tag = 'input window, operand 0, single buffered']
    #allocation3 [shape = 's32[1]{0}', space=sflag, size = 0x4, scoped, tag = 'scoped memory for tpu_custom_call.1']
    #allocation4 [shape = 's32[1]{0}', space=sflag, size = 0x4, scoped, tag = 'scoped memory for tpu_custom_call.1']
    #allocation5 [shape = 'u8[8192]{0}', space=vmem, size = 0x2000, scoped, tag = 'input window, operand 1, single buffered']
    #allocation6 [shape = 's32[1]{0}', space=sflag, size = 0x4, scoped, tag = 'scoped memory for tpu_custom_call.1']
    #allocation7 [shape = 'u8[16384]{0}', space=vmem, size = 0x4000, scoped, tag = 'output window, operand 0, single buffered']
    %7 = vsyncpa [#allocation3], 0
    %8 = vsyncpa [#allocation6], 0
    %9 = vsyncpa [#allocation4], 0
    // Predicated region
    $region2: #{tpu_custom_call.1} parent=1 // pred_check
      _
    $region3: #{tpu_custom_call.1} parent=1 // pred_check_branch
      %11 = sbr.rel (0) target = $region5
    $region4: #{tpu_custom_call.1} parent=1 // pred_region
      %s13 = ssub.s32 512, 512
      %14 = vsyncadd [#allocation3], %s13
      %s15 = sshll.u32 [#allocation2], 4
      %s16 = int_to_ptr.vmem [resolvable:$true] %s15
      %21 = dma.hbm_to_vmem [thread:$0]  %s0, 512, %s16, [#allocation3], 128, 128, 8
    $region5: #{tpu_custom_call.1} parent=1 // pred_fallthru
      _
    // Predicated region
    $region6: #{tpu_custom_call.1} parent=1 // pred_check
      _
    $region7: #{tpu_custom_call.1} parent=1 // pred_check_branch
      %23 = sbr.rel (0) target = $region9
    $region8: #{tpu_custom_call.1} parent=1 // pred_region
      %s25 = ssub.s32 256, 256
      %26 = vsyncadd [#allocation6], %s25
      %s27 = sshll.u32 [#allocation5], 4
      %s28 = int_to_ptr.vmem [resolvable:$true] %s27
      %33 = dma.hbm_to_vmem [thread:$0]  %s1, 256, %s28, [#allocation6], 128, 128, 8
    $region9: #{tpu_custom_call.1} parent=1 // pred_fallthru
      _
    // Predicated region
    $region10: #{tpu_custom_call.1} parent=1 // pred_check
      _
    $region11: #{tpu_custom_call.1} parent=1 // pred_check_branch
      %35 = sbr.rel (0) target = $region13
    $region12: #{tpu_custom_call.1} parent=1 // pred_region
      %36 = dma.done [#allocation3], 512
    $region13: #{tpu_custom_call.1} parent=1 // pred_fallthru
      _
    // Predicated region
    $region14: #{tpu_custom_call.1} parent=1 // pred_check
      _
    $region15: #{tpu_custom_call.1} parent=1 // pred_check_branch
      %38 = sbr.rel (0) target = $region17
    $region16: #{tpu_custom_call.1} parent=1 // pred_region
      %39 = dma.done [#allocation6], 256
    $region17: #{tpu_custom_call.1} parent=1 // pred_fallthru
      _
    %v40 = vld [vmem:[#allocation2] sm:$0xff]
    %v41 = vld [vmem:[#allocation2 + $0x8] sm:$0xff]
    %v42 = vld [vmem:[#allocation2 + $0x10] sm:$0xff]
    %v43 = vld [vmem:[#allocation2 + $0x18] sm:$0xff]
    %v44 = vld [vmem:[#allocation5] sm:$0xff]
    %v45 = vld [vmem:[#allocation5 + $0x8] sm:$0xff]
    %v46 = vadd.f32 %v40, %v44
    %v47 = vadd.f32 %v41, %v45
    %v48 = vadd.f32 %v42, %v44
    %v49 = vadd.f32 %v43, %v45
    %50 = vst [vmem:[#allocation7] sm:$0xff] %v46
    %51 = vst [vmem:[#allocation7 + $0x8] sm:$0xff] %v47
    %52 = vst [vmem:[#allocation7 + $0x10] sm:$0xff] %v48
    %53 = vst [vmem:[#allocation7 + $0x18] sm:$0xff] %v49
    // Predicated region
    $region18: #{tpu_custom_call.1} parent=1 // pred_check
      _
    $region19: #{tpu_custom_call.1} parent=1 // pred_check_branch
      %55 = sbr.rel (0) target = $region21
    $region20: #{tpu_custom_call.1} parent=1 // pred_region
      %s57 = ssub.s32 512, 512
      %58 = vsyncadd [#allocation4], %s57
      %s59 = sshll.u32 [#allocation7], 4
      %s60 = int_to_ptr.vmem [resolvable:$true] %s59
      %65 = dma.vmem_to_hbm [thread:$0]  %s60, 512, %s2, [#allocation4], 128, 128, 8
    $region21: #{tpu_custom_call.1} parent=1 // pred_fallthru
      _
    // Predicated region
    $region22: #{tpu_custom_call.1} parent=1 // pred_check
      _
    $region23: #{tpu_custom_call.1} parent=1 // pred_check_branch
      %67 = sbr.rel (0) target = $region25
    $region24: #{tpu_custom_call.1} parent=1 // pred_region
      %68 = dma.done [#allocation4], 512
    $region25: #{tpu_custom_call.1} parent=1 // pred_fallthru
      _
    %69 = vsyncpa [#allocation3], 1
    %70 = vsyncpa [#allocation6], 1
    %71 = vsyncpa [#allocation4], 1

</llo_original>
